<compile_context>
chip_gen: v5e
topology: v5e:2x2
jax: 0.10.0
libtpu: 0.0.40
codegen_flags: <defaults>
</compile_context>

<pallas_src>
import math
import functools

import jax
import jax.numpy as jnp
from jax import lax
from jax.experimental import pallas as pl
from jax.experimental.pallas import tpu as pltpu


def _round_up(x, m):
    return ((x + m - 1) // m) * m


def _make_kernel(*, n, tm, tn, want_max, margin_is_2d):
    """Build a tile kernel specialised on (n, tm, tn, mode, margin layout)."""
    grid_rows = pl.cdiv(n, tm)
    grid_cols = pl.cdiv(n, tn)
    ragged_r = (n % tm) != 0
    ragged_c = (n % tn) != 0

    def kernel(scores_ref, margin_ref, diag_col_ref, diag_row_ref,
               row_stat_ref, col_stat_ref):
        i = pl.program_id(0)          # row-tile index   (outer, "parallel")
        j = pl.program_id(1)          # column-tile index (inner, reduction)

        s = scores_ref[...].astype(jnp.float32)                  # (tm, tn)
        off_c = pl.multiple_of(j * tn, tn)
        if margin_is_2d:
            m = margin_ref[...].astype(jnp.float32)              # (tm, tn) tiled
        else:
            m = margin_ref[:, pl.ds(off_c, tn)]                  # (1, tn) resident
        d1 = diag_col_ref[...]                                   # (tm, 1)  diag[row]
        d2 = diag_row_ref[:, pl.ds(off_c, tn)]                   # (1, tn)  diag[col]

        # Row-stat accumulator lives across the inner j loop; init once per i.
        # (All costs are >= 0, so 0 is a valid init for both max and sum.)
        @pl.when(j == 0)
        def _():
            row_stat_ref[...] = jnp.zeros_like(row_stat_ref)

        def hinge(masked):
            cost_s = jnp.maximum(m + s - d1, 0.0)    # relu(margin + s - diag[row])
            cost_im = jnp.maximum(m + s - d2, 0.0)   # relu(margin + s - diag[col])
            if masked:
                row_g = i * tm + lax.broadcasted_iota(jnp.int32, (tm, tn), 0)
                col_g = j * tn + lax.broadcasted_iota(jnp.int32, (tm, tn), 1)
                parts = []
                if want_max:
                    parts.append(row_g == col_g)     # eye mask (max path only)
                if ragged_r:
                    parts.append(row_g >= n)         # garbage rows of edge tile
                if ragged_c:
                    parts.append(col_g >= n)         # garbage cols of edge tile
                bad = functools.reduce(jnp.logical_or, parts)
                # Select on the COST (not the score): any garbage bit pattern
                # (incl. NaN) in the out-of-bounds region is forced to exactly 0.
                cost_s = jnp.where(bad, 0.0, cost_s)
                cost_im = jnp.where(bad, 0.0, cost_im)
            return cost_s, cost_im

        def accumulate(cost_s, cost_im):
            if want_max:
                r = jnp.max(cost_s, axis=1, keepdims=True)        # (tm, 1)
                c = jnp.max(cost_im, axis=0, keepdims=True)       # (1, tn)
                row_stat_ref[...] = jnp.maximum(row_stat_ref[...], r)
            else:
                r = jnp.sum(cost_s, axis=1, keepdims=True)        # exact f32 sums
                c = jnp.sum(cost_im, axis=0, keepdims=True)
                row_stat_ref[...] = row_stat_ref[...] + r
            # Per-row-tile column partials: each j owns a disjoint lane slice,
            # so this is a plain write (no cross-i accumulation -> the outer
            # axis can be megacore-parallel on v7x).
            col_stat_ref[:, :, pl.ds(off_c, tn)] = c.reshape(1, 1, tn)

        # Gate all masking work to the few tiles that actually need it:
        # ragged edge tiles and (max mode only) tiles intersecting the diagonal.
        conds = []
        if ragged_r:
            conds.append(i == grid_rows - 1)
        if ragged_c:
            conds.append(j == grid_cols - 1)
        if want_max:
            conds.append(jnp.logical_and(i * tm < (j + 1) * tn,
                                         j * tn < (i + 1) * tm))

        if not conds:                       # statically mask-free (sum mode, aligned n)
            accumulate(*hinge(False))
        else:
            needs_mask = functools.reduce(jnp.logical_or, conds)

            @pl.when(jnp.logical_not(needs_mask))
            def _():
                accumulate(*hinge(False))   # fast path: no iota/compare/select

            @pl.when(needs_mask)
            def _():
                accumulate(*hinge(True))    # edge / diagonal tiles only

    return kernel


@functools.partial(jax.jit,
                   static_argnames=("n", "tm", "tn", "want_max", "margin_is_2d"))
def _contrastive_pallas(scores, margin_op, diag_col, diag_row, *,
                        n, tm, tn, want_max, margin_is_2d):
    grid_rows = pl.cdiv(n, tm)
    grid_cols = pl.cdiv(n, tn)
    npad_r = grid_rows * tm
    npad_c = grid_cols * tn

    kernel = _make_kernel(n=n, tm=tm, tn=tn, want_max=want_max,
                          margin_is_2d=margin_is_2d)

    if margin_is_2d:
        margin_spec = pl.BlockSpec((tm, tn), lambda i, j: (i, j))      # tiled (N,N)
    else:
        margin_spec = pl.BlockSpec((1, npad_c), lambda i, j: (0, 0))   # grid-resident

    # Advisory cost estimate so XLA overlaps neighbours with this mem-bound call.
    bytes_accessed = (n * n * scores.dtype.itemsize
                      + (n * n * margin_op.dtype.itemsize if margin_is_2d
                         else npad_c * 4)
                      + npad_r * 4 + npad_c * 4
                      + npad_r * 4 + grid_rows * npad_c * 4)
    cost = pl.CostEstimate(flops=8 * n * n, transcendentals=0,
                           bytes_accessed=int(bytes_accessed))

    tile_bytes = tm * tn * scores.dtype.itemsize
    if margin_is_2d:
        tile_bytes += tm * tn * margin_op.dtype.itemsize
    vmem_est = (2 * tile_bytes            # double-buffered score (+2-D margin) tiles
                + 2 * npad_c * 4          # resident margin row + diag row
                + 4 * tm * 4              # diag col + row-stat blocks (double buffered)
                + 2 * npad_c * 4)         # col-stat block (double buffered)
    vmem_limit = int(min(64 * 1024 * 1024, max(32 * 1024 * 1024, 2 * vmem_est)))

    return pl.pallas_call(
        kernel,
        out_shape=(
            jax.ShapeDtypeStruct((npad_r, 1), jnp.float32),            # per-row stat
            jax.ShapeDtypeStruct((grid_rows, 1, npad_c), jnp.float32), # per-row-tile col partials
        ),
        grid_spec=pltpu.PrefetchScalarGridSpec(
            num_scalar_prefetch=0,
            grid=(grid_rows, grid_cols),
            in_specs=[
                pl.BlockSpec((tm, tn), lambda i, j: (i, j)),       # scores (unpadded, ragged ok)
                margin_spec,                                       # margin (resident row or tiled)
                pl.BlockSpec((tm, 1), lambda i, j: (i, 0)),        # diag as column
                pl.BlockSpec((1, npad_c), lambda i, j: (0, 0)),    # diag as row (resident)
            ],
            out_specs=(
                pl.BlockSpec((tm, 1), lambda i, j: (i, 0)),            # row accumulator
                pl.BlockSpec((1, 1, npad_c), lambda i, j: (i, 0, 0)),  # col partials (resident per i)
            ),
        ),
        compiler_params=pltpu.CompilerParams(
            dimension_semantics=("parallel", "arbitrary"),
            vmem_limit_bytes=vmem_limit),
        cost_estimate=cost,
    )(scores, margin_op, diag_col, diag_row)


class ContrastiveLoss:
    """JAX/Pallas port of the PyTorch ContrastiveLoss module."""

    def __init__(self, margin=0.0):
        self.margin = float(margin)

    def __call__(self, scores, hard_negative=True, labels=None,
                 soft_margin='linear', mode='train', tm=512, tn=1024):
        scores = jnp.asarray(scores)
        if not jnp.issubdtype(scores.dtype, jnp.floating):
            scores = scores.astype(jnp.float32)
        n = scores.shape[0]

        # --- soft-margin handling (matches the PyTorch branches) -------------
        if labels is None:
            margin = jnp.asarray(self.margin, jnp.float32)
        else:
            labels = jnp.asarray(labels)
            if not jnp.issubdtype(labels.dtype, jnp.floating):
                labels = labels.astype(jnp.float32)
            if soft_margin == 'linear':
                margin = self.margin * labels
            elif soft_margin == 'exponential':
                margin = self.margin * (jnp.power(10.0, labels) - 1.0) / 9.0
            elif soft_margin == 'sin':
                margin = self.margin * (jnp.sin(math.pi * labels - math.pi / 2.0)
                                        / 2.0 + 0.5)
            else:
                raise ValueError(f"unknown soft_margin: {soft_margin}")
        margin = jnp.asarray(margin)
        margin_is_2d = (margin.ndim == 2)
        want_max = (mode == 'train') and bool(hard_negative)

        diag = jnp.diagonal(scores).astype(jnp.float32)            # (n,)
        if margin_is_2d:
            margin_diag = jnp.diagonal(margin).astype(jnp.float32)
        else:
            margin_diag = margin.astype(jnp.float32)                # scalar or (n,)

        # --- tile selection (dtype-aware sublane minimum, (x,128) lanes) -----
        itemsize = scores.dtype.itemsize
        sub = max(8, 32 // max(1, itemsize))        # 8 for f32, 16 for bf16, 32 for i8
        tm = _round_up(max(1, min(int(tm), _round_up(n, sub))), sub)
        tn = _round_up(max(1, min(int(tn), _round_up(n, 128))), 128)
        grid_rows = pl.cdiv(n, tm)
        grid_cols = pl.cdiv(n, tn)
        npad_r = grid_rows * tm
        npad_c = grid_cols * tn

        # Tiny O(N) side inputs; the (N,N) scores themselves stream UNPADDED.
        diag_col = jnp.zeros((npad_r, 1), jnp.float32).at[:n, 0].set(diag)
        diag_row = jnp.zeros((1, npad_c), jnp.float32).at[0, :n].set(diag)
        if margin_is_2d:
            margin_op = margin                         # streamed tiled in its own dtype
        else:
            if margin.ndim == 0:
                mrow = jnp.broadcast_to(margin.astype(jnp.float32), (n,))
            else:
                mrow = margin.astype(jnp.float32)
            margin_op = jnp.zeros((1, npad_c), jnp.float32).at[0, :n].set(mrow)

        row_stat, col_stat = _contrastive_pallas(
            scores, margin_op, diag_col, diag_row,
            n=n, tm=tm, tn=tn, want_max=want_max, margin_is_2d=margin_is_2d)

        col_partial = col_stat[:, 0, :n]               # (grid_rows, n)

        if want_max:
            cost_s_max = row_stat[:n, 0]
            cost_im_max = jnp.max(col_partial, axis=0)
            return cost_s_max.sum() + cost_im_max.sum()

        # Sum/mean modes: remove the diagonal term relu(margin_rr) that PyTorch
        # masks with eye() — exact O(N) correction instead of an in-kernel mask.
        diag_corr = jnp.maximum(margin_diag, 0.0)
        cost_s_mean = (row_stat[:n, 0] - diag_corr) / n
        cost_im_mean = (jnp.sum(col_partial, axis=0) - diag_corr) / n

        if mode == 'predict':
            # TODO(synk): argsort/top-k renormalization has no clean Pallas TPU
            # equivalent; this tail is plain-JAX glue on kernel-produced means.
            p = margin - (cost_s_mean + cost_im_mean) / 2.0
            p = jnp.clip(p, 0.0, margin)
            idx = jnp.argsort(p)
            ratio = n // 10 + 1
            return p / jnp.mean(p[idx[-ratio:]])
        elif mode == 'warmup':
            return cost_s_mean.sum() + cost_im_mean.sum()
        elif mode == 'train':       # hard_negative == False
            return cost_s_mean.sum() + cost_im_mean.sum()
        elif mode == 'eval_loss':
            return cost_s_mean + cost_im_mean
        else:
            raise ValueError(f"unknown mode: {mode}")


def _reference(scores, margin):
    """Pure-JAX mirror of the PyTorch forward (train/warmup/eval paths)."""
    scores = jnp.asarray(scores, jnp.float32)
    n = scores.shape[0]
    diag = jnp.diag(scores).reshape(n, 1)
    eye = jnp.eye(n, dtype=bool)
    cost_s = jnp.maximum(margin + scores - diag, 0.0)
    cost_im = jnp.maximum(margin + scores - diag.T, 0.0)
    cost_s = jnp.where(eye, 0.0, cost_s)
    cost_im = jnp.where(eye, 0.0, cost_im)
    hard = cost_s.max(axis=1).sum() + cost_im.max(axis=0).sum()
    mean = cost_s.mean(axis=1).sum() + cost_im.mean(axis=0).sum()
    eval_loss = cost_s.mean(axis=1) + cost_im.mean(axis=0)
    return hard, mean, eval_loss


if __name__ == "__main__":
    key = jax.random.PRNGKey(0)
    k1, k2, k3 = jax.random.split(key, 3)
    crit = ContrastiveLoss(margin=0.3)

    # --- case 1: tiny batch, scalar margin, single (partial) tile -------------
    N1 = 8
    s1 = jax.random.normal(k1, (N1, N1), dtype=jnp.float32)
    h1 = jax.block_until_ready(crit(s1, hard_negative=True, mode='train'))
    m1 = jax.block_until_ready(crit(s1, hard_negative=False, mode='train'))
    e1 = jax.block_until_ready(crit(s1, mode='eval_loss'))
    rh1, rm1, re1 = _reference(s1, 0.3)
    assert jnp.allclose(h1, rh1, rtol=1e-4, atol=1e-4), (h1, rh1)
    assert jnp.allclose(m1, rm1, rtol=1e-4, atol=1e-4), (m1, rm1)
    assert jnp.allclose(e1, re1, rtol=1e-4, atol=1e-4)

    # --- case 2: non-tile-multiple N (ragged edge tiles), 1-D soft margin -----
    N2 = 300
    s2 = jax.random.normal(k2, (N2, N2), dtype=jnp.float32)
    labels = jax.random.uniform(k3, (N2,), dtype=jnp.float32)
    h2 = jax.block_until_ready(crit(s2, hard_negative=True, labels=labels,
                                    soft_margin='linear', mode='train',
                                    tm=64, tn=128))
    w2 = jax.block_until_ready(crit(s2, labels=labels, soft_margin='linear',
                                    mode='warmup', tm=64, tn=128))
    e2 = jax.block_until_ready(crit(s2, labels=labels, soft_margin='linear',
                                    mode='eval_loss', tm=64, tn=128))
    rh2, rm2, re2 = _reference(s2, 0.3 * labels)
    assert jnp.allclose(h2, rh2, rtol=1e-4, atol=1e-4), (h2, rh2)
    assert jnp.allclose(w2, rm2, rtol=1e-4, atol=1e-4), (w2, rm2)
    assert jnp.allclose(e2, re2, rtol=1e-4, atol=1e-4)

    # --- case 3: bf16 scores streamed end-to-end (default tiles) --------------
    s3 = s2.astype(jnp.bfloat16)
    h3 = jax.block_until_ready(crit(s3, hard_negative=True, labels=labels,
                                    soft_margin='linear', mode='train'))
    w3 = jax.block_until_ready(crit(s3, labels=labels, soft_margin='linear',
                                    mode='warmup'))
    rh3, rm3, _ = _reference(s3.astype(jnp.float32), 0.3 * labels)
    assert jnp.allclose(h3, rh3, rtol=1e-3, atol=1e-3), (h3, rh3)
    assert jnp.allclose(w3, rm3, rtol=1e-3, atol=1e-3), (w3, rm3)

    print("KERNEL_OK")
</pallas_src>

<mosaic_0001>
module attributes {stable_mosaic.version = 11 : i64} {
  func.func @kernel(%arg0: i32, %arg1: i32, %arg2: memref<8x128xf32, #tpu.memory_space<vmem>>, %arg3: memref<1x128xf32, #tpu.memory_space<vmem>>, %arg4: memref<8x1xf32, #tpu.memory_space<vmem>>, %arg5: memref<1x128xf32, #tpu.memory_space<vmem>>, %arg6: memref<8x1xf32, #tpu.memory_space<vmem>>, %arg7: memref<1x1x128xf32, #tpu.memory_space<vmem>>) attributes {dimension_semantics = [#tpu.dimension_semantics<parallel>, #tpu.dimension_semantics<arbitrary>], iteration_bounds = array<i64: 1, 1>, scalar_prefetch = 0 : i64, scratch_operands = 0 : i64, tpu.core_type = #tpu.core_type<tc>, window_params = [{transform_indices = @transform_0, window_bounds = array<i64: 8, 128>}, {pipeline_mode = #tpu.pipeline_mode<synchronous>, transform_indices = @transform_1, window_bounds = array<i64: 1, 128>}, {transform_indices = @transform_2, window_bounds = array<i64: 8, 1>}, {pipeline_mode = #tpu.pipeline_mode<synchronous>, transform_indices = @transform_3, window_bounds = array<i64: 1, 128>}, {transform_indices = @transform_4, window_bounds = array<i64: 8, 1>}, {transform_indices = @transform_5, window_bounds = array<i64: 1, 1, 128>}]} {
    %c0 = arith.constant 0 : index
    %c0_0 = arith.constant 0 : index
    %0 = vector.load %arg2[%c0, %c0_0] : memref<8x128xf32, #tpu.memory_space<vmem>>, vector<8x128xf32>
    %c128_i32 = arith.constant 128 : i32
    %1 = arith.muli %arg1, %c128_i32 : i32
    %2 = tpu.assume_multiple %1, 128 : i32
    %c0_1 = arith.constant 0 : index
    %3 = arith.index_cast %2 : i32 to index
    %4 = vector.load %arg3[%c0_1, %3] : memref<1x128xf32, #tpu.memory_space<vmem>>, vector<1x128xf32>
    %c0_2 = arith.constant 0 : index
    %c0_3 = arith.constant 0 : index
    %5 = vector.load %arg4[%c0_2, %c0_3] : memref<8x1xf32, #tpu.memory_space<vmem>>, vector<8x1xf32>
    %c0_4 = arith.constant 0 : index
    %6 = arith.index_cast %2 : i32 to index
    %7 = vector.load %arg5[%c0_4, %6] : memref<1x128xf32, #tpu.memory_space<vmem>>, vector<1x128xf32>
    %c0_i32 = arith.constant 0 : i32
    %8 = arith.cmpi eq, %arg1, %c0_i32 : i32
    %9 = arith.extui %8 : i1 to i32
    %c0_i32_5 = arith.constant 0 : i32
    %10 = arith.cmpi ne, %9, %c0_i32_5 : i32
    scf.if %10 {
      %cst = arith.constant 0.000000e+00 : f32
      %27 = vector.broadcast %cst : f32 to vector<8x1xf32>
      %c0_13 = arith.constant 0 : index
      %c0_14 = arith.constant 0 : index
      %28 = vector.load %arg6[%c0_13, %c0_14] : memref<8x1xf32, #tpu.memory_space<vmem>>, vector<8x1xf32>
      tpu.vector_store %arg6[%c0_13, %c0_14], %27 {strides = array<i32>} : memref<8x1xf32, #tpu.memory_space<vmem>>, vector<8x1xf32>,
    } else {
    }
    %c0_i32_6 = arith.constant 0 : i32
    %11 = arith.cmpi eq, %arg1, %c0_i32_6 : i32
    %c8_i32 = arith.constant 8 : i32
    %12 = arith.muli %arg0, %c8_i32 : i32
    %c1_i32 = arith.constant 1 : i32
    %13 = arith.addi %arg1, %c1_i32 : i32
    %c128_i32_7 = arith.constant 128 : i32
    %14 = arith.muli %13, %c128_i32_7 : i32
    %15 = arith.cmpi slt, %12, %14 : i32
    %c128_i32_8 = arith.constant 128 : i32
    %16 = arith.muli %arg1, %c128_i32_8 : i32
    %c1_i32_9 = arith.constant 1 : i32
    %17 = arith.addi %arg0, %c1_i32_9 : i32
    %c8_i32_10 = arith.constant 8 : i32
    %18 = arith.muli %17, %c8_i32_10 : i32
    %19 = arith.cmpi slt, %16, %18 : i32
    %20 = arith.andi %15, %19 : i1
    %21 = arith.ori %11, %20 : i1
    %true = arith.constant true
    %22 = arith.xori %21, %true : i1
    %23 = arith.extui %22 : i1 to i32
    %c0_i32_11 = arith.constant 0 : i32
    %24 = arith.cmpi ne, %23, %c0_i32_11 : i32
    scf.if %24 {
      %27 = vector.broadcast %4 : vector<1x128xf32> to vector<8x128xf32>
      %28 = arith.addf %27, %0 : vector<8x128xf32>
      %29 = vector.broadcast %5 : vector<8x1xf32> to vector<8x128xf32>
      %30 = arith.subf %28, %29 : vector<8x128xf32>
      %cst = arith.constant 0.000000e+00 : f32
      %31 = vector.broadcast %cst : f32 to vector<8x128xf32>
      %32 = arith.maximumf %30, %31 : vector<8x128xf32>
      %33 = vector.broadcast %4 : vector<1x128xf32> to vector<8x128xf32>
      %34 = arith.addf %33, %0 : vector<8x128xf32>
      %35 = vector.broadcast %7 : vector<1x128xf32> to vector<8x128xf32>
      %36 = arith.subf %34, %35 : vector<8x128xf32>
      %cst_13 = arith.constant 0.000000e+00 : f32
      %37 = vector.broadcast %cst_13 : f32 to vector<8x128xf32>
      %38 = arith.maximumf %36, %37 : vector<8x128xf32>
      %cst_14 = arith.constant dense<0xFF800000> : vector<8xf32>
      %39 = vector.multi_reduction <maximumf>, %32, %cst_14 [1] : vector<8x128xf32> to vector<8xf32>
      %40 = vector.shape_cast %39 : vector<8xf32> to vector<8x1xf32>
      %cst_15 = arith.constant dense<0xFF800000> : vector<128xf32>
      %41 = vector.multi_reduction <maximumf>, %38, %cst_15 [0] : vector<8x128xf32> to vector<128xf32>
      %42 = vector.shape_cast %41 : vector<128xf32> to vector<1x128xf32>
      %c0_16 = arith.constant 0 : index
      %c0_17 = arith.constant 0 : index
      %43 = vector.load %arg6[%c0_16, %c0_17] : memref<8x1xf32, #tpu.memory_space<vmem>>, vector<8x1xf32>
      %44 = arith.maximumf %43, %40 : vector<8x1xf32>
      %c0_18 = arith.constant 0 : index
      %c0_19 = arith.constant 0 : index
      %45 = vector.load %arg6[%c0_18, %c0_19] : memref<8x1xf32, #tpu.memory_space<vmem>>, vector<8x1xf32>
      tpu.vector_store %arg6[%c0_18, %c0_19], %44 {strides = array<i32>} : memref<8x1xf32, #tpu.memory_space<vmem>>, vector<8x1xf32>,
      %46 = vector.shape_cast %42 : vector<1x128xf32> to vector<1x1x128xf32>
      %c0_20 = arith.constant 0 : index
      %c0_21 = arith.constant 0 : index
      %47 = arith.index_cast %2 : i32 to index
      %48 = vector.load %arg7[%c0_20, %c0_21, %47] : memref<1x1x128xf32, #tpu.memory_space<vmem>>, vector<1x1x128xf32>
      tpu.vector_store %arg7[%c0_20, %c0_21, %47], %46 {strides = array<i32>} : memref<1x1x128xf32, #tpu.memory_space<vmem>>, vector<1x1x128xf32>,
    } else {
    }
    %25 = arith.extui %21 : i1 to i32
    %c0_i32_12 = arith.constant 0 : i32
    %26 = arith.cmpi ne, %25, %c0_i32_12 : i32
    scf.if %26 {
      %27 = vector.broadcast %4 : vector<1x128xf32> to vector<8x128xf32>
      %28 = arith.addf %27, %0 : vector<8x128xf32>
      %29 = vector.broadcast %5 : vector<8x1xf32> to vector<8x128xf32>
      %30 = arith.subf %28, %29 : vector<8x128xf32>
      %cst = arith.constant 0.000000e+00 : f32
      %31 = vector.broadcast %cst : f32 to vector<8x128xf32>
      %32 = arith.maximumf %30, %31 : vector<8x128xf32>
      %33 = vector.broadcast %4 : vector<1x128xf32> to vector<8x128xf32>
      %34 = arith.addf %33, %0 : vector<8x128xf32>
      %35 = vector.broadcast %7 : vector<1x128xf32> to vector<8x128xf32>
      %36 = arith.subf %34, %35 : vector<8x128xf32>
      %cst_13 = arith.constant 0.000000e+00 : f32
      %37 = vector.broadcast %cst_13 : f32 to vector<8x128xf32>
      %38 = arith.maximumf %36, %37 : vector<8x128xf32>
      %c8_i32_14 = arith.constant 8 : i32
      %39 = arith.muli %arg0, %c8_i32_14 : i32
      %40 = tpu.iota {dimensions = array<i32: 0>} : vector<8x128xi32>
      %41 = vector.broadcast %39 : i32 to vector<8x128xi32>
      %42 = arith.addi %41, %40 : vector<8x128xi32>
      %c128_i32_15 = arith.constant 128 : i32
      %43 = arith.muli %arg1, %c128_i32_15 : i32
      %44 = tpu.iota {dimensions = array<i32: 1>} : vector<8x128xi32>
      %45 = vector.broadcast %43 : i32 to vector<8x128xi32>
      %46 = arith.addi %45, %44 : vector<8x128xi32>
      %47 = arith.cmpi eq, %42, %46 : vector<8x128xi32>
      %c8_i32_16 = arith.constant 8 : i32
      %48 = vector.broadcast %c8_i32_16 : i32 to vector<8x128xi32>
      %49 = arith.cmpi sge, %46, %48 : vector<8x128xi32>
      %50 = arith.ori %47, %49 : vector<8x128xi1>
      %cst_17 = arith.constant 0.000000e+00 : f32
      %51 = vector.broadcast %cst_17 : f32 to vector<8x128xf32>
      %52 = arith.select %50, %51, %32 : vector<8x128xi1>, vector<8x128xf32>
      %cst_18 = arith.constant 0.000000e+00 : f32
      %53 = vector.broadcast %cst_18 : f32 to vector<8x128xf32>
      %54 = arith.select %50, %53, %38 : vector<8x128xi1>, vector<8x128xf32>
      %cst_19 = arith.constant dense<0xFF800000> : vector<8xf32>
      %55 = vector.multi_reduction <maximumf>, %52, %cst_19 [1] : vector<8x128xf32> to vector<8xf32>
      %56 = vector.shape_cast %55 : vector<8xf32> to vector<8x1xf32>
      %cst_20 = arith.constant dense<0xFF800000> : vector<128xf32>
      %57 = vector.multi_reduction <maximumf>, %54, %cst_20 [0] : vector<8x128xf32> to vector<128xf32>
      %58 = vector.shape_cast %57 : vector<128xf32> to vector<1x128xf32>
      %c0_21 = arith.constant 0 : index
      %c0_22 = arith.constant 0 : index
      %59 = vector.load %arg6[%c0_21, %c0_22] : memref<8x1xf32, #tpu.memory_space<vmem>>, vector<8x1xf32>
      %60 = arith.maximumf %59, %56 : vector<8x1xf32>
      %c0_23 = arith.constant 0 : index
      %c0_24 = arith.constant 0 : index
      %61 = vector.load %arg6[%c0_23, %c0_24] : memref<8x1xf32, #tpu.memory_space<vmem>>, vector<8x1xf32>
      tpu.vector_store %arg6[%c0_23, %c0_24], %60 {strides = array<i32>} : memref<8x1xf32, #tpu.memory_space<vmem>>, vector<8x1xf32>,
      %62 = vector.shape_cast %58 : vector<1x128xf32> to vector<1x1x128xf32>
      %c0_25 = arith.constant 0 : index
      %c0_26 = arith.constant 0 : index
      %63 = arith.index_cast %2 : i32 to index
      %64 = vector.load %arg7[%c0_25, %c0_26, %63] : memref<1x1x128xf32, #tpu.memory_space<vmem>>, vector<1x1x128xf32>
      tpu.vector_store %arg7[%c0_25, %c0_26, %63], %62 {strides = array<i32>} : memref<1x1x128xf32, #tpu.memory_space<vmem>>, vector<1x1x128xf32>,
    } else {
    }
    return
  }
  func.func @transform_0(%arg0: i32, %arg1: i32) -> (i32, i32) {
    %c0_i32 = arith.constant 0 : i32
    return %arg0, %arg1 : i32, i32
  }
  func.func @transform_1(%arg0: i32, %arg1: i32) -> (i32, i32) {
    %c0_i32 = arith.constant 0 : i32
    %c0_i32_0 = arith.constant 0 : i32
    %c0_i32_1 = arith.constant 0 : i32
    return %c0_i32, %c0_i32_0 : i32, i32
  }
  func.func @transform_2(%arg0: i32, %arg1: i32) -> (i32, i32) {
    %c0_i32 = arith.constant 0 : i32
    %c0_i32_0 = arith.constant 0 : i32
    return %arg0, %c0_i32 : i32, i32
  }
  func.func @transform_3(%arg0: i32, %arg1: i32) -> (i32, i32) {
    %c0_i32 = arith.constant 0 : i32
    %c0_i32_0 = arith.constant 0 : i32
    %c0_i32_1 = arith.constant 0 : i32
    return %c0_i32, %c0_i32_0 : i32, i32
  }
  func.func @transform_4(%arg0: i32, %arg1: i32) -> (i32, i32) {
    %c0_i32 = arith.constant 0 : i32
    %c0_i32_0 = arith.constant 0 : i32
    return %arg0, %c0_i32 : i32, i32
  }
  func.func @transform_5(%arg0: i32, %arg1: i32) -> (i32, i32, i32) {
    %c0_i32 = arith.constant 0 : i32
    %c0_i32_0 = arith.constant 0 : i32
    %c0_i32_1 = arith.constant 0 : i32
    return %arg0, %c0_i32, %c0_i32_0 : i32, i32, i32
  }
}

</mosaic_0001>

<llo_original>
// kernel: _contrastive_pallas.1
$region0: #{_contrastive_pallas.1}
  #allocation0 [shape = 'u32[]', space=smem, size = 0x4, offset = 0x4, fixed_abs, tag = 'smem constant byte address 0x4 - core index']
  #allocation1 [shape = 'u32[72,128]{1,0:T(1,128)}', space=vmem, size = 0x9000, scoped, tag = 'internal scratch']
  %s0 = inlined_call_operand.vmem [shape: f32[8,8], index: 0, kind: input, shape index: {}]
  %s1 = inlined_call_operand.vmem [shape: f32[1,128], index: 1, kind: input, shape index: {}]
  %s2 = inlined_call_operand.vmem [shape: f32[8,1], index: 2, kind: input, shape index: {}]
  %s3 = inlined_call_operand.vmem [shape: f32[1,128], index: 3, kind: input, shape index: {}]
  %s4 = inlined_call_operand.vmem [shape: f32[8,1], index: 4, kind: output, shape index: {0}]
  %s5 = inlined_call_operand.hbm [shape: f32[1,1,128], index: 5, kind: output, shape index: {1}]
  %6 = xla_tuple %s4, %s5
  %s7 = sld [smem:[#allocation0]]
  $region46: #{_contrastive_pallas.1} parent=0
    _
  %s9 = ssub.s32 1, %s7
  %s10 = scalar_select 0, %s9, %s7
  $region1: #{_contrastive_pallas.1} parent=0
    #allocation2 [shape = 'u8[512]{0}', space=vmem, size = 0x400, scoped, tag = 'output window, operand 1, single buffered']
    #allocation3 [shape = 's32[1]{0}', space=sflag, size = 0x4, scoped, tag = 'scoped memory for _contrastive_pallas.1']
    %11 = vsyncpa [#allocation3], 0
    // Predicated region
    $region2: #{_contrastive_pallas.1} parent=1 // pred_check
      _
    $region3: #{_contrastive_pallas.1} parent=1 // pred_check_branch
      %13 = sbr.rel (0) target = $region5
    $region4: #{_contrastive_pallas.1} parent=1 // pred_region
      _
    $region5: #{_contrastive_pallas.1} parent=1 // pred_fallthru
      _
    // Predicated region
    $region6: #{_contrastive_pallas.1} parent=1 // pred_check
      _
    $region7: #{_contrastive_pallas.1} parent=1 // pred_check_branch
      %15 = sbr.rel (0) target = $region9
    $region8: #{_contrastive_pallas.1} parent=1 // pred_region
      _
    $region9: #{_contrastive_pallas.1} parent=1 // pred_fallthru
      _
    // Predicated region
    $region10: #{_contrastive_pallas.1} parent=1 // pred_check
      _
    $region11: #{_contrastive_pallas.1} parent=1 // pred_check_branch
      %17 = sbr.rel (0) target = $region13
    $region12: #{_contrastive_pallas.1} parent=1 // pred_region
      _
    $region13: #{_contrastive_pallas.1} parent=1 // pred_fallthru
      _
    // Predicated region
    $region14: #{_contrastive_pallas.1} parent=1 // pred_check
      _
    $region15: #{_contrastive_pallas.1} parent=1 // pred_check_branch
      %19 = sbr.rel (0) target = $region17
    $region16: #{_contrastive_pallas.1} parent=1 // pred_region
      _
    $region17: #{_contrastive_pallas.1} parent=1 // pred_fallthru
      _
    %v20 = vld [vmem:[%s0] sm:$0xff]
    %s21 = smul.u32 0, 128
    %s22 = sshra.s32 %s21, 7
    %s23 = sand.u32 %s21, 127
    %s24 = scalar_lea.vmem %s1, %s22
    %v25 = vld [vmem:[%s24] sm:$0x1]
    %v26 = vld [vmem:[%s2] sm:$0xff]
    %s27 = scalar_lea.vmem %s3, %s22
    %v28 = vld [vmem:[%s27] sm:$0x1]
    %p29 = scmp.eq.s32.totalorder 0, 0
    // Predicated region
    $region18: #{_contrastive_pallas.1} parent=1 // pred_check
      %p30 = pneg %p29
    $region19: #{_contrastive_pallas.1} parent=1 // pred_check_branch
      %32 = sbr.rel (%p30) target = $region21
    $region20: #{_contrastive_pallas.1} parent=1 // pred_region
      %vm33 = vcmask 7168
      %34 = vst.msk [vmem:[%s4] sm:$0xff] %vm33, 0.0
    $region21: #{_contrastive_pallas.1} parent=1 // pred_fallthru
      _
    %s35 = smul.u32 0, 8
    %s36 = sadd.s32 0, 1
    %s37 = smul.u32 %s36, 128
    %p38 = scmp.lt.s32.totalorder %s35, %s37
    %s39 = sadd.s32 0, 1
    %s40 = smul.u32 %s39, 8
    %p41 = scmp.lt.s32.totalorder %s21, %s40
    %p42 = pnand %p38, %p41
    %p43 = pneg %p42
    %p44 = por %p29, %p43
    // Predicated region
    $region22: #{_contrastive_pallas.1} parent=1 // pred_check
      %p45 = pneg %p44
    $region23: #{_contrastive_pallas.1} parent=1 // pred_check_branch
      %47 = sbr.rel (%p45) target = $region25
    $region24: #{_contrastive_pallas.1} parent=1 // pred_region
      %v49 = vperm.slane %v25, 0
      %v51 = vadd.f32 %v49, %v20
      %53 = vset.pattern.permute.xlu0 0
      %54 = vperm.xlu0 %53, %v26
      %v55 = vpop.permute.xlu0 %54
      %v57 = vsub.f32 %v51, %v55
      %v58 = vmax.f32 %v57, 0.0
      %v60 = vperm.slane %v28, 0
      %v62 = vsub.f32 %v51, %v60
      %v63 = vmax.f32 %v62, 0.0
      %v64 = vlaneseq
      %v65 = vshrl.u32 %v64, 7
      %v66 = vstv %s35
      %v67 = vadd.s32 %v66, %v65
      %v68 = vlaneseq
      %v69 = vand.u32 %v68, 127
      %v70 = vstv %s21
      %v71 = vadd.s32 %v70, %v69
      %vm72 = vcmp.eq.s32.totalorder %v67, %v71
      %vm73 = vcmp.ge.s32.totalorder %v71, 8
      %vm74 = vmor %vm72, %vm73
      %v75 = vsel %vm74, 0.0, %v58
      %v76 = vsel %vm74, 0.0, %v63
      %77 = vmax.xlane.f32.xlu0 %v75
      %v78 = vpop.xlane.xlu0 %77
      %v79 = vrot.slane %v76, 4
      %v80 = vmax.f32 %v76, %v79
      %v81 = vrot.slane %v80, 2
      %v82 = vmax.f32 %v80, %v81
      %v83 = vrot.slane %v82, 1
      %v84 = vmax.f32 %v82, %v83
      %v85 = vld [vmem:[%s4] sm:$0xff]
      %v86 = vmax.f32 %v85, %v78
      %vm87 = vcmask 7168
      %88 = vst.msk [vmem:[%s4] sm:$0xff] %vm87, %v86
      %s89 = scalar_lea.vmem [#allocation2], %s22
      %90 = vst [vmem:[%s89] sm:$0x1] %v84
    $region25: #{_contrastive_pallas.1} parent=1 // pred_fallthru
      _
    %p91 = pneg %p44
    // Predicated region
    $region26: #{_contrastive_pallas.1} parent=1 // pred_check
      _
    $region27: #{_contrastive_pallas.1} parent=1 // pred_check_branch
      %93 = sbr.rel (%p44) target = $region29
    $region28: #{_contrastive_pallas.1} parent=1 // pred_region
      %v95 = vperm.slane %v25, 0
      %v97 = vadd.f32 %v95, %v20
      %99 = vset.pattern.permute.xlu0 0
      %100 = vperm.xlu0 %99, %v26
      %v101 = vpop.permute.xlu0 %100
      %v103 = vsub.f32 %v97, %v101
      %v104 = vmax.f32 %v103, 0.0
      %v106 = vperm.slane %v28, 0
      %v108 = vsub.f32 %v97, %v106
      %v109 = vmax.f32 %v108, 0.0
      %110 = vmax.xlane.f32.xlu0 %v104
      %v111 = vpop.xlane.xlu0 %110
      %v112 = vrot.slane %v109, 4
      %v113 = vmax.f32 %v109, %v112
      %v114 = vrot.slane %v113, 2
      %v115 = vmax.f32 %v113, %v114
      %v116 = vrot.slane %v115, 1
      %v117 = vmax.f32 %v115, %v116
      %v118 = vld [vmem:[%s4] sm:$0xff]
      %v119 = vmax.f32 %v118, %v111
      %vm120 = vcmask 7168
      %121 = vst.msk [vmem:[%s4] sm:$0xff] %vm120, %v119
      %s122 = scalar_lea.vmem [#allocation2], %s22
      %123 = vst [vmem:[%s122] sm:$0x1] %v117
    $region29: #{_contrastive_pallas.1} parent=1 // pred_fallthru
      _
    // Predicated region
    $region30: #{_contrastive_pallas.1} parent=1 // pred_check
      _
    $region31: #{_contrastive_pallas.1} parent=1 // pred_check_branch
      %125 = sbr.rel (0) target = $region33
    $region32: #{_contrastive_pallas.1} parent=1 // pred_region
      _
    $region33: #{_contrastive_pallas.1} parent=1 // pred_fallthru
      _
    // Predicated region
    $region34: #{_contrastive_pallas.1} parent=1 // pred_check
      _
    $region35: #{_contrastive_pallas.1} parent=1 // pred_check_branch
      %127 = sbr.rel (0) target = $region37
    $region36: #{_contrastive_pallas.1} parent=1 // pred_region
      %129 = vsyncadd [#allocation3], 0
      %s131 = sshll.u32 [#allocation2], 4
      %s132 = int_to_ptr.vmem [resolvable:$true] %s131
      %s133 = sshll.u32 %s5, 4
      %s134 = int_to_ptr.hbm [resolvable:$true] %s133
      %136 = dma.vmem_to_hbm [thread:$0]  %s132, 16, %s134, [#allocation3]
    $region37: #{_contrastive_pallas.1} parent=1 // pred_fallthru
      _
    // Predicated region
    $region38: #{_contrastive_pallas.1} parent=1 // pred_check
      _
    $region39: #{_contrastive_pallas.1} parent=1 // pred_check_branch
      %138 = sbr.rel (0) target = $region41
    $region40: #{_contrastive_pallas.1} parent=1 // pred_region
      _
    $region41: #{_contrastive_pallas.1} parent=1 // pred_fallthru
      _
    // Predicated region
    $region42: #{_contrastive_pallas.1} parent=1 // pred_check
      _
    $region43: #{_contrastive_pallas.1} parent=1 // pred_check_branch
      %140 = sbr.rel (0) target = $region45
    $region44: #{_contrastive_pallas.1} parent=1 // pred_region
      %142 = dma.done [#allocation3], 16
    $region45: #{_contrastive_pallas.1} parent=1 // pred_fallthru
      _
    %143 = vsyncpa [#allocation3], 1

</llo_original>
